<compile_context>
chip_gen: v7x
topology: tpu7x:2x2x1
jax: 0.10.0
libtpu: 0.0.40
codegen_flags: <defaults>
</compile_context>

<pallas_src>
import functools

import jax
import jax.numpy as jnp
from jax.experimental import pallas as pl
from jax.experimental.pallas import tpu as pltpu

LANE = 128    # vreg lane width
SUBLANE = 8   # f32 sublane count


def _mlp_kernel(params_ref, x_ref, o_ref, *, n_hidden):
    """One (rows, 128) batch tile of the 2-layer MLP.

    params_ref : SMEM f32[H*F + H + H*O + O]  flat [w1t | b1 | w2 | b2]
    x_ref      : VMEM f32(F, rows, 128)       batch dense over sublanes+lanes
    o_ref      : VMEM f32(O, rows, 128)
    """
    F = x_ref.shape[0]
    O = o_ref.shape[0]
    H = n_hidden

    # Flat-slab offsets (row-major packing done in the wrapper).
    w1_off = 0                 # w1t[j, f] at j*F + f   (torch hidden.weight layout)
    b1_off = H * F             # b1[j]
    w2_off = b1_off + H        # w2[j, o] at j*O + o    (torch predict.weight.T)
    b2_off = w2_off + H * O    # b2[o]

    # Load the F input planes once; each is a dense (rows, 128) tile.
    x = [x_ref[f] for f in range(F)]

    # NOTE: the F- and H-contractions are scalar(SMEM) * vector(VPU) MACs because
    # F, H, O are tiny here.  If this Net is generalized to F or H >= ~128, switch
    # these loops to jnp.dot(..., preferred_element_type=jnp.float32) so the MXU
    # does the K reduction instead of a serial VPU chain.
    ys = [None] * O
    for j in range(H):                       # static unroll, H = 10
        # Hidden unit j: h_j = relu(sum_f w1t[j, f] * x_f + b1[j])
        h = None
        for f in range(F):                   # static unroll, F = 1
            t = params_ref[w1_off + j * F + f] * x[f]
            h = t if h is None else h + t
        h = jnp.maximum(h + params_ref[b1_off + j], 0.0)
        # Output accumulation: y_o += w2[j, o] * h_j
        for o in range(O):                   # static unroll, O = 1
            t = params_ref[w2_off + j * O + o] * h
            ys[o] = t if ys[o] is None else ys[o] + t

    for o in range(O):
        o_ref[o] = (ys[o] + params_ref[b2_off + o]).astype(o_ref.dtype)


def net_forward(x, w1t, b1, w2, b2, *, block_rows=256):
    """Forward pass matching torch `Net`.

    x  : (B, n_feature) f32
    w1t: (n_hidden, n_feature)   -- torch `hidden.weight` layout
    b1 : (n_hidden,)
    w2 : (n_hidden, n_output)    -- torch `predict.weight` transposed
    b2 : (n_output,)
    returns (B, n_output) f32
    """
    B, F = x.shape
    H, O = w2.shape

    # --- Batch layout: dense over sublanes AND lanes -> (F, R, 128). ---
    b_pad = pl.cdiv(B, LANE) * LANE
    R = b_pad // LANE
    xt = x.astype(jnp.float32).T                      # (F, B); reshape-only for F == 1
    if b_pad != B:
        xt = jnp.pad(xt, ((0, 0), (0, b_pad - B)))    # single pad, no zeros+scatter
    xr = xt.reshape(F, R, LANE)

    # --- Batch-tile rows: multiple of 8 (sublane alignment), big enough to amortize
    #     per-grid-step overhead, capped so the grid has >= 2 steps once R >= 16 to
    #     let a megacore (v7x) split the "parallel" batch axis. ---
    if R >= 16:
        rb = min(block_rows, pl.cdiv(R, 2))
        rb = max(SUBLANE, (rb // SUBLANE) * SUBLANE)
    elif R >= SUBLANE:
        rb = SUBLANE
    else:
        rb = R                                         # full extent (< 8 is allowed)
    grid = (pl.cdiv(R, rb),)                           # ragged last block handled by Pallas

    # --- Pack all params into ONE flat f32 slab living in SMEM (1 tiny copy instead
    #     of 4 micro-DMAs into padded VMEM tiles). ---
    params = jnp.concatenate([
        w1t.reshape(-1), b1.reshape(-1), w2.reshape(-1), b2.reshape(-1)
    ]).astype(jnp.float32)

    kernel = functools.partial(_mlp_kernel, n_hidden=H)

    out = pl.pallas_call(
        kernel,
        out_shape=jax.ShapeDtypeStruct((O, R, LANE), jnp.float32),
        grid=grid,
        in_specs=[
            pl.BlockSpec(memory_space=pltpu.MemorySpace.SMEM),   # packed params
            pl.BlockSpec((F, rb, LANE), lambda i: (0, i, 0)),    # x tile (sublane+lane dense)
        ],
        out_specs=pl.BlockSpec((O, rb, LANE), lambda i: (0, i, 0)),
        compiler_params=pltpu.CompilerParams(
            # Batch grid axis is embarrassingly parallel -> megacore sharding on v7x.
            dimension_semantics=("parallel",),
        ),
    )(params, xr)

    # Back to the caller's (B, n_output) layout; padded batch lanes hold relu(b1)-
    # derived garbage and are sliced off.  For O == 1 the transpose is a pure
    # reshape; callers that can consume (O, B) directly may skip it.
    return out.reshape(O, b_pad)[:, :B].T


def init_params(key, n_feature, n_hidden, n_output):
    """Deterministic init mirroring torch.nn.Linear's U(-1/sqrt(fan_in), +1/sqrt(fan_in))."""
    k1, k2, k3, k4 = jax.random.split(key, 4)
    bound1 = 1.0 / (n_feature ** 0.5)
    bound2 = 1.0 / (n_hidden ** 0.5)
    w1t = jax.random.uniform(k1, (n_hidden, n_feature), jnp.float32, -bound1, bound1)
    b1 = jax.random.uniform(k2, (n_hidden,), jnp.float32, -bound1, bound1)
    w2 = jax.random.uniform(k3, (n_hidden, n_output), jnp.float32, -bound2, bound2)
    b2 = jax.random.uniform(k4, (n_output,), jnp.float32, -bound2, bound2)
    return w1t, b1, w2, b2


if __name__ == "__main__":
    # Matches the reference script: x = unsqueeze(linspace(-1, 1, 100), dim=1) -> (100, 1)
    n_feature, n_hidden, n_output = 1, 10, 1
    batch = 100

    key = jax.random.PRNGKey(0)
    w1t, b1, w2, b2 = init_params(key, n_feature, n_hidden, n_output)

    x = jnp.expand_dims(jnp.linspace(-1.0, 1.0, batch, dtype=jnp.float32), axis=1)

    out = net_forward(x, w1t, b1, w2, b2)
    out = jax.block_until_ready(out)

    # Pure-JAX reference (torch semantics: relu(x @ W1.T + b1) @ W2 + b2).
    ref = jnp.maximum(x @ w1t.T + b1, 0.0) @ w2 + b2
    assert out.shape == (batch, n_output)
    assert jnp.allclose(out, ref, atol=1e-5, rtol=1e-5)

    print("KERNEL_OK")
</pallas_src>

<mosaic_0001>
module attributes {stable_mosaic.version = 11 : i64} {
  func.func @_mlp_kernel(%arg0: i32, %arg1: memref<31xf32, #tpu.memory_space<smem>>, %arg2: memref<1x1x128xf32, #tpu.memory_space<vmem>>, %arg3: memref<1x1x128xf32, #tpu.memory_space<vmem>>) attributes {dimension_semantics = [#tpu.dimension_semantics<parallel>], iteration_bounds = array<i64: 1>, scalar_prefetch = 0 : i64, scratch_operands = 0 : i64, tpu.core_type = #tpu.core_type<tc>, window_params = [{transform_indices = @transform_0, window_bounds = array<i64: 31>}, {transform_indices = @transform_1, window_bounds = array<i64: 1, 1, 128>}, {transform_indices = @transform_2, window_bounds = array<i64: 1, 1, 128>}]} {
    %c0 = arith.constant 0 : index
    %c0_0 = arith.constant 0 : index
    %c0_1 = arith.constant 0 : index
    %0 = vector.load %arg2[%c0, %c0_0, %c0_1] : memref<1x1x128xf32, #tpu.memory_space<vmem>>, vector<1x1x128xf32>
    %1 = vector.shape_cast %0 : vector<1x1x128xf32> to vector<1x128xf32>
    %c0_2 = arith.constant 0 : index
    %2 = memref.load %arg1[%c0_2] : memref<31xf32, #tpu.memory_space<smem>>
    %3 = vector.broadcast %2 : f32 to vector<1x128xf32>
    %4 = arith.mulf %3, %1 : vector<1x128xf32>
    %c10 = arith.constant 10 : index
    %5 = memref.load %arg1[%c10] : memref<31xf32, #tpu.memory_space<smem>>
    %6 = vector.broadcast %5 : f32 to vector<1x128xf32>
    %7 = arith.addf %4, %6 : vector<1x128xf32>
    %cst = arith.constant 0.000000e+00 : f32
    %8 = vector.broadcast %cst : f32 to vector<1x128xf32>
    %9 = arith.maximumf %7, %8 : vector<1x128xf32>
    %c20 = arith.constant 20 : index
    %10 = memref.load %arg1[%c20] : memref<31xf32, #tpu.memory_space<smem>>
    %11 = vector.broadcast %10 : f32 to vector<1x128xf32>
    %12 = arith.mulf %11, %9 : vector<1x128xf32>
    %c1 = arith.constant 1 : index
    %13 = memref.load %arg1[%c1] : memref<31xf32, #tpu.memory_space<smem>>
    %14 = vector.broadcast %13 : f32 to vector<1x128xf32>
    %15 = arith.mulf %14, %1 : vector<1x128xf32>
    %c11 = arith.constant 11 : index
    %16 = memref.load %arg1[%c11] : memref<31xf32, #tpu.memory_space<smem>>
    %17 = vector.broadcast %16 : f32 to vector<1x128xf32>
    %18 = arith.addf %15, %17 : vector<1x128xf32>
    %cst_3 = arith.constant 0.000000e+00 : f32
    %19 = vector.broadcast %cst_3 : f32 to vector<1x128xf32>
    %20 = arith.maximumf %18, %19 : vector<1x128xf32>
    %c21 = arith.constant 21 : index
    %21 = memref.load %arg1[%c21] : memref<31xf32, #tpu.memory_space<smem>>
    %22 = vector.broadcast %21 : f32 to vector<1x128xf32>
    %23 = arith.mulf %22, %20 : vector<1x128xf32>
    %24 = arith.addf %12, %23 : vector<1x128xf32>
    %c2 = arith.constant 2 : index
    %25 = memref.load %arg1[%c2] : memref<31xf32, #tpu.memory_space<smem>>
    %26 = vector.broadcast %25 : f32 to vector<1x128xf32>
    %27 = arith.mulf %26, %1 : vector<1x128xf32>
    %c12 = arith.constant 12 : index
    %28 = memref.load %arg1[%c12] : memref<31xf32, #tpu.memory_space<smem>>
    %29 = vector.broadcast %28 : f32 to vector<1x128xf32>
    %30 = arith.addf %27, %29 : vector<1x128xf32>
    %cst_4 = arith.constant 0.000000e+00 : f32
    %31 = vector.broadcast %cst_4 : f32 to vector<1x128xf32>
    %32 = arith.maximumf %30, %31 : vector<1x128xf32>
    %c22 = arith.constant 22 : index
    %33 = memref.load %arg1[%c22] : memref<31xf32, #tpu.memory_space<smem>>
    %34 = vector.broadcast %33 : f32 to vector<1x128xf32>
    %35 = arith.mulf %34, %32 : vector<1x128xf32>
    %36 = arith.addf %24, %35 : vector<1x128xf32>
    %c3 = arith.constant 3 : index
    %37 = memref.load %arg1[%c3] : memref<31xf32, #tpu.memory_space<smem>>
    %38 = vector.broadcast %37 : f32 to vector<1x128xf32>
    %39 = arith.mulf %38, %1 : vector<1x128xf32>
    %c13 = arith.constant 13 : index
    %40 = memref.load %arg1[%c13] : memref<31xf32, #tpu.memory_space<smem>>
    %41 = vector.broadcast %40 : f32 to vector<1x128xf32>
    %42 = arith.addf %39, %41 : vector<1x128xf32>
    %cst_5 = arith.constant 0.000000e+00 : f32
    %43 = vector.broadcast %cst_5 : f32 to vector<1x128xf32>
    %44 = arith.maximumf %42, %43 : vector<1x128xf32>
    %c23 = arith.constant 23 : index
    %45 = memref.load %arg1[%c23] : memref<31xf32, #tpu.memory_space<smem>>
    %46 = vector.broadcast %45 : f32 to vector<1x128xf32>
    %47 = arith.mulf %46, %44 : vector<1x128xf32>
    %48 = arith.addf %36, %47 : vector<1x128xf32>
    %c4 = arith.constant 4 : index
    %49 = memref.load %arg1[%c4] : memref<31xf32, #tpu.memory_space<smem>>
    %50 = vector.broadcast %49 : f32 to vector<1x128xf32>
    %51 = arith.mulf %50, %1 : vector<1x128xf32>
    %c14 = arith.constant 14 : index
    %52 = memref.load %arg1[%c14] : memref<31xf32, #tpu.memory_space<smem>>
    %53 = vector.broadcast %52 : f32 to vector<1x128xf32>
    %54 = arith.addf %51, %53 : vector<1x128xf32>
    %cst_6 = arith.constant 0.000000e+00 : f32
    %55 = vector.broadcast %cst_6 : f32 to vector<1x128xf32>
    %56 = arith.maximumf %54, %55 : vector<1x128xf32>
    %c24 = arith.constant 24 : index
    %57 = memref.load %arg1[%c24] : memref<31xf32, #tpu.memory_space<smem>>
    %58 = vector.broadcast %57 : f32 to vector<1x128xf32>
    %59 = arith.mulf %58, %56 : vector<1x128xf32>
    %60 = arith.addf %48, %59 : vector<1x128xf32>
    %c5 = arith.constant 5 : index
    %61 = memref.load %arg1[%c5] : memref<31xf32, #tpu.memory_space<smem>>
    %62 = vector.broadcast %61 : f32 to vector<1x128xf32>
    %63 = arith.mulf %62, %1 : vector<1x128xf32>
    %c15 = arith.constant 15 : index
    %64 = memref.load %arg1[%c15] : memref<31xf32, #tpu.memory_space<smem>>
    %65 = vector.broadcast %64 : f32 to vector<1x128xf32>
    %66 = arith.addf %63, %65 : vector<1x128xf32>
    %cst_7 = arith.constant 0.000000e+00 : f32
    %67 = vector.broadcast %cst_7 : f32 to vector<1x128xf32>
    %68 = arith.maximumf %66, %67 : vector<1x128xf32>
    %c25 = arith.constant 25 : index
    %69 = memref.load %arg1[%c25] : memref<31xf32, #tpu.memory_space<smem>>
    %70 = vector.broadcast %69 : f32 to vector<1x128xf32>
    %71 = arith.mulf %70, %68 : vector<1x128xf32>
    %72 = arith.addf %60, %71 : vector<1x128xf32>
    %c6 = arith.constant 6 : index
    %73 = memref.load %arg1[%c6] : memref<31xf32, #tpu.memory_space<smem>>
    %74 = vector.broadcast %73 : f32 to vector<1x128xf32>
    %75 = arith.mulf %74, %1 : vector<1x128xf32>
    %c16 = arith.constant 16 : index
    %76 = memref.load %arg1[%c16] : memref<31xf32, #tpu.memory_space<smem>>
    %77 = vector.broadcast %76 : f32 to vector<1x128xf32>
    %78 = arith.addf %75, %77 : vector<1x128xf32>
    %cst_8 = arith.constant 0.000000e+00 : f32
    %79 = vector.broadcast %cst_8 : f32 to vector<1x128xf32>
    %80 = arith.maximumf %78, %79 : vector<1x128xf32>
    %c26 = arith.constant 26 : index
    %81 = memref.load %arg1[%c26] : memref<31xf32, #tpu.memory_space<smem>>
    %82 = vector.broadcast %81 : f32 to vector<1x128xf32>
    %83 = arith.mulf %82, %80 : vector<1x128xf32>
    %84 = arith.addf %72, %83 : vector<1x128xf32>
    %c7 = arith.constant 7 : index
    %85 = memref.load %arg1[%c7] : memref<31xf32, #tpu.memory_space<smem>>
    %86 = vector.broadcast %85 : f32 to vector<1x128xf32>
    %87 = arith.mulf %86, %1 : vector<1x128xf32>
    %c17 = arith.constant 17 : index
    %88 = memref.load %arg1[%c17] : memref<31xf32, #tpu.memory_space<smem>>
    %89 = vector.broadcast %88 : f32 to vector<1x128xf32>
    %90 = arith.addf %87, %89 : vector<1x128xf32>
    %cst_9 = arith.constant 0.000000e+00 : f32
    %91 = vector.broadcast %cst_9 : f32 to vector<1x128xf32>
    %92 = arith.maximumf %90, %91 : vector<1x128xf32>
    %c27 = arith.constant 27 : index
    %93 = memref.load %arg1[%c27] : memref<31xf32, #tpu.memory_space<smem>>
    %94 = vector.broadcast %93 : f32 to vector<1x128xf32>
    %95 = arith.mulf %94, %92 : vector<1x128xf32>
    %96 = arith.addf %84, %95 : vector<1x128xf32>
    %c8 = arith.constant 8 : index
    %97 = memref.load %arg1[%c8] : memref<31xf32, #tpu.memory_space<smem>>
    %98 = vector.broadcast %97 : f32 to vector<1x128xf32>
    %99 = arith.mulf %98, %1 : vector<1x128xf32>
    %c18 = arith.constant 18 : index
    %100 = memref.load %arg1[%c18] : memref<31xf32, #tpu.memory_space<smem>>
    %101 = vector.broadcast %100 : f32 to vector<1x128xf32>
    %102 = arith.addf %99, %101 : vector<1x128xf32>
    %cst_10 = arith.constant 0.000000e+00 : f32
    %103 = vector.broadcast %cst_10 : f32 to vector<1x128xf32>
    %104 = arith.maximumf %102, %103 : vector<1x128xf32>
    %c28 = arith.constant 28 : index
    %105 = memref.load %arg1[%c28] : memref<31xf32, #tpu.memory_space<smem>>
    %106 = vector.broadcast %105 : f32 to vector<1x128xf32>
    %107 = arith.mulf %106, %104 : vector<1x128xf32>
    %108 = arith.addf %96, %107 : vector<1x128xf32>
    %c9 = arith.constant 9 : index
    %109 = memref.load %arg1[%c9] : memref<31xf32, #tpu.memory_space<smem>>
    %110 = vector.broadcast %109 : f32 to vector<1x128xf32>
    %111 = arith.mulf %110, %1 : vector<1x128xf32>
    %c19 = arith.constant 19 : index
    %112 = memref.load %arg1[%c19] : memref<31xf32, #tpu.memory_space<smem>>
    %113 = vector.broadcast %112 : f32 to vector<1x128xf32>
    %114 = arith.addf %111, %113 : vector<1x128xf32>
    %cst_11 = arith.constant 0.000000e+00 : f32
    %115 = vector.broadcast %cst_11 : f32 to vector<1x128xf32>
    %116 = arith.maximumf %114, %115 : vector<1x128xf32>
    %c29 = arith.constant 29 : index
    %117 = memref.load %arg1[%c29] : memref<31xf32, #tpu.memory_space<smem>>
    %118 = vector.broadcast %117 : f32 to vector<1x128xf32>
    %119 = arith.mulf %118, %116 : vector<1x128xf32>
    %120 = arith.addf %108, %119 : vector<1x128xf32>
    %c30 = arith.constant 30 : index
    %121 = memref.load %arg1[%c30] : memref<31xf32, #tpu.memory_space<smem>>
    %122 = vector.broadcast %121 : f32 to vector<1x128xf32>
    %123 = arith.addf %120, %122 : vector<1x128xf32>
    %c0_12 = arith.constant 0 : index
    %c0_13 = arith.constant 0 : index
    %c0_14 = arith.constant 0 : index
    %124 = vector.load %arg3[%c0_12, %c0_13, %c0_14] : memref<1x1x128xf32, #tpu.memory_space<vmem>>, vector<1x1x128xf32>
    %125 = vector.shape_cast %124 : vector<1x1x128xf32> to vector<1x128xf32>
    %126 = vector.shape_cast %123 : vector<1x128xf32> to vector<1x1x128xf32>
    tpu.vector_store %arg3[%c0_12, %c0_13, %c0_14], %126 {strides = array<i32>} : memref<1x1x128xf32, #tpu.memory_space<vmem>>, vector<1x1x128xf32>,
    return
  }
  func.func @transform_0(%arg0: i32) -> i32 {
    %c0_i32 = arith.constant 0 : i32
    %c0_i32_0 = arith.constant 0 : i32
    return %c0_i32 : i32
  }
  func.func @transform_1(%arg0: i32) -> (i32, i32, i32) {
    %c0_i32 = arith.constant 0 : i32
    %c0_i32_0 = arith.constant 0 : i32
    %c0_i32_1 = arith.constant 0 : i32
    return %c0_i32, %arg0, %c0_i32_0 : i32, i32, i32
  }
  func.func @transform_2(%arg0: i32) -> (i32, i32, i32) {
    %c0_i32 = arith.constant 0 : i32
    %c0_i32_0 = arith.constant 0 : i32
    %c0_i32_1 = arith.constant 0 : i32
    return %c0_i32, %arg0, %c0_i32_0 : i32, i32, i32
  }
}

</mosaic_0001>

<llo_original>
// kernel: tpu_custom_call.1
$region0: #{tpu_custom_call.1}
  #allocation0 [shape = 'u32[]', space=smem, size = 0x4, offset = 0x4, fixed_abs, tag = 'smem constant byte address 0x4 - core index']
  #allocation1 [shape = 'u32[144,128]{1,0:T(1,128)}', space=vmem, size = 0x12000, scoped, tag = 'internal scratch']
  %s0 = inlined_call_operand.hbm [shape: f32[31], index: 0, kind: input, shape index: {}]
  %s1 = inlined_call_operand.vmem [shape: f32[1,1,128], index: 1, kind: input, shape index: {}]
  %s2 = inlined_call_operand.hbm [shape: f32[1,1,128], index: 2, kind: output, shape index: {}]
  %s3 = sld [smem:[#allocation0]]
  $region22: #{tpu_custom_call.1} parent=0
    _
  %s5 = ssub.s32 1, %s3
  %s6 = scalar_select 0, %s5, %s3
  $region1: #{tpu_custom_call.1} parent=0
    #allocation2 [shape = 'u8[512]{0}', space=smem, size = 0x200, scoped, tag = 'input window, operand 0, single buffered']
    #allocation3 [shape = 's32[1]{0}', space=sflag, size = 0x4, scoped, tag = 'scoped memory for tpu_custom_call.1']
    #allocation4 [shape = 's32[1]{0}', space=sflag, size = 0x4, scoped, tag = 'scoped memory for tpu_custom_call.1']
    #allocation5 [shape = 'u8[512]{0}', space=vmem, size = 0x400, scoped, tag = 'output window, operand 0, single buffered']
    %7 = vsyncpa [#allocation4], 0
    %8 = vsyncpa [#allocation3], 0
    // Predicated region
    $region2: #{tpu_custom_call.1} parent=1 // pred_check
      _
    $region3: #{tpu_custom_call.1} parent=1 // pred_check_branch
      %10 = sbr.rel (0) target = $region5
    $region4: #{tpu_custom_call.1} parent=1 // pred_region
      %s12 = ssub.s32 16, 16
      %13 = vsyncadd [#allocation4], %s12
      %16 = dma.hbm_to_smem %s0, 16, [#allocation2], [#allocation4]
    $region5: #{tpu_custom_call.1} parent=1 // pred_fallthru
      _
    // Predicated region
    $region6: #{tpu_custom_call.1} parent=1 // pred_check
      _
    $region7: #{tpu_custom_call.1} parent=1 // pred_check_branch
      %18 = sbr.rel (0) target = $region9
    $region8: #{tpu_custom_call.1} parent=1 // pred_region
      _
    $region9: #{tpu_custom_call.1} parent=1 // pred_fallthru
      _
    // Predicated region
    $region10: #{tpu_custom_call.1} parent=1 // pred_check
      _
    $region11: #{tpu_custom_call.1} parent=1 // pred_check_branch
      %20 = sbr.rel (0) target = $region13
    $region12: #{tpu_custom_call.1} parent=1 // pred_region
      %21 = dma.done [#allocation4], 16
    $region13: #{tpu_custom_call.1} parent=1 // pred_fallthru
      _
    %22 = sfence
    %v23 = vld [vmem:[%s1] sm:$0x1]
    %s24 = sld [smem:[#allocation2]]
    %v25 = vstv %s24
    %v26 = vmul.f32 %v25, %v23
    %s27 = sld [smem:[#allocation2 + $0xa]]
    %v28 = vstv %s27
    %v29 = vadd.f32 %v26, %v28
    %v30 = vmax.f32 %v29, 0.0
    %s31 = sld [smem:[#allocation2 + $0x14]]
    %v32 = vstv %s31
    %v33 = vmul.f32 %v32, %v30
    %s34 = sld [smem:[#allocation2 + $0x1]]
    %v35 = vstv %s34
    %v36 = vmul.f32 %v35, %v23
    %s37 = sld [smem:[#allocation2 + $0xb]]
    %v38 = vstv %s37
    %v39 = vadd.f32 %v36, %v38
    %v40 = vmax.f32 %v39, 0.0
    %s41 = sld [smem:[#allocation2 + $0x15]]
    %v42 = vstv %s41
    %v43 = vmul.f32 %v42, %v40
    %v44 = vadd.f32 %v33, %v43
    %s45 = sld [smem:[#allocation2 + $0x2]]
    %v46 = vstv %s45
    %v47 = vmul.f32 %v46, %v23
    %s48 = sld [smem:[#allocation2 + $0xc]]
    %v49 = vstv %s48
    %v50 = vadd.f32 %v47, %v49
    %v51 = vmax.f32 %v50, 0.0
    %s52 = sld [smem:[#allocation2 + $0x16]]
    %v53 = vstv %s52
    %v54 = vmul.f32 %v53, %v51
    %v55 = vadd.f32 %v44, %v54
    %s56 = sld [smem:[#allocation2 + $0x3]]
    %v57 = vstv %s56
    %v58 = vmul.f32 %v57, %v23
    %s59 = sld [smem:[#allocation2 + $0xd]]
    %v60 = vstv %s59
    %v61 = vadd.f32 %v58, %v60
    %v62 = vmax.f32 %v61, 0.0
    %s63 = sld [smem:[#allocation2 + $0x17]]
    %v64 = vstv %s63
    %v65 = vmul.f32 %v64, %v62
    %v66 = vadd.f32 %v55, %v65
    %s67 = sld [smem:[#allocation2 + $0x4]]
    %v68 = vstv %s67
    %v69 = vmul.f32 %v68, %v23
    %s70 = sld [smem:[#allocation2 + $0xe]]
    %v71 = vstv %s70
    %v72 = vadd.f32 %v69, %v71
    %v73 = vmax.f32 %v72, 0.0
    %s74 = sld [smem:[#allocation2 + $0x18]]
    %v75 = vstv %s74
    %v76 = vmul.f32 %v75, %v73
    %v77 = vadd.f32 %v66, %v76
    %s78 = sld [smem:[#allocation2 + $0x5]]
    %v79 = vstv %s78
    %v80 = vmul.f32 %v79, %v23
    %s81 = sld [smem:[#allocation2 + $0xf]]
    %v82 = vstv %s81
    %v83 = vadd.f32 %v80, %v82
    %v84 = vmax.f32 %v83, 0.0
    %s85 = sld [smem:[#allocation2 + $0x19]]
    %v86 = vstv %s85
    %v87 = vmul.f32 %v86, %v84
    %v88 = vadd.f32 %v77, %v87
    %s89 = sld [smem:[#allocation2 + $0x6]]
    %v90 = vstv %s89
    %v91 = vmul.f32 %v90, %v23
    %s92 = sld [smem:[#allocation2 + $0x10]]
    %v93 = vstv %s92
    %v94 = vadd.f32 %v91, %v93
    %v95 = vmax.f32 %v94, 0.0
    %s96 = sld [smem:[#allocation2 + $0x1a]]
    %v97 = vstv %s96
    %v98 = vmul.f32 %v97, %v95
    %v99 = vadd.f32 %v88, %v98
    %s100 = sld [smem:[#allocation2 + $0x7]]
    %v101 = vstv %s100
    %v102 = vmul.f32 %v101, %v23
    %s103 = sld [smem:[#allocation2 + $0x11]]
    %v104 = vstv %s103
    %v105 = vadd.f32 %v102, %v104
    %v106 = vmax.f32 %v105, 0.0
    %s107 = sld [smem:[#allocation2 + $0x1b]]
    %v108 = vstv %s107
    %v109 = vmul.f32 %v108, %v106
    %v110 = vadd.f32 %v99, %v109
    %s111 = sld [smem:[#allocation2 + $0x8]]
    %v112 = vstv %s111
    %v113 = vmul.f32 %v112, %v23
    %s114 = sld [smem:[#allocation2 + $0x12]]
    %v115 = vstv %s114
    %v116 = vadd.f32 %v113, %v115
    %v117 = vmax.f32 %v116, 0.0
    %s118 = sld [smem:[#allocation2 + $0x1c]]
    %v119 = vstv %s118
    %v120 = vmul.f32 %v119, %v117
    %v121 = vadd.f32 %v110, %v120
    %s122 = sld [smem:[#allocation2 + $0x9]]
    %v123 = vstv %s122
    %v124 = vmul.f32 %v123, %v23
    %s125 = sld [smem:[#allocation2 + $0x13]]
    %v126 = vstv %s125
    %v127 = vadd.f32 %v124, %v126
    %v128 = vmax.f32 %v127, 0.0
    %s129 = sld [smem:[#allocation2 + $0x1d]]
    %v130 = vstv %s129
    %v131 = vmul.f32 %v130, %v128
    %v132 = vadd.f32 %v121, %v131
    %s133 = sld [smem:[#allocation2 + $0x1e]]
    %v134 = vstv %s133
    %v135 = vadd.f32 %v132, %v134
    %136 = vst [vmem:[#allocation5] sm:$0x1] %v135
    // Predicated region
    $region14: #{tpu_custom_call.1} parent=1 // pred_check
      _
    $region15: #{tpu_custom_call.1} parent=1 // pred_check_branch
      %138 = sbr.rel (0) target = $region17
    $region16: #{tpu_custom_call.1} parent=1 // pred_region
      %s140 = ssub.s32 16, 16
      %141 = vsyncadd [#allocation3], %s140
      %s143 = sshll.u32 [#allocation5], 4
      %s144 = int_to_ptr.vmem [resolvable:$true] %s143
      %146 = dma.vmem_to_hbm [thread:$0]  %s144, 16, %s2, [#allocation3]
    $region17: #{tpu_custom_call.1} parent=1 // pred_fallthru
      _
    // Predicated region
    $region18: #{tpu_custom_call.1} parent=1 // pred_check
      _
    $region19: #{tpu_custom_call.1} parent=1 // pred_check_branch
      %148 = sbr.rel (0) target = $region21
    $region20: #{tpu_custom_call.1} parent=1 // pred_region
      %149 = dma.done [#allocation3], 16
    $region21: #{tpu_custom_call.1} parent=1 // pred_fallthru
      _
    %150 = vsyncpa [#allocation3], 1
    %151 = vsyncpa [#allocation4], 1

</llo_original>
